<compile_context>
chip_gen: v7x
topology: tpu7x:2x2x1
jax: 0.10.0
libtpu: 0.0.40
codegen_flags: <defaults>
</compile_context>

<pallas_src>
import functools

import jax
import jax.numpy as jnp
from jax.experimental import pallas as pl
from jax.experimental.pallas import tpu as pltpu

_LANES = 128
_MAX_S_TILE = 1024          # hard cap on sublane rows per HW tile
_VMEM_BUDGET = 8 * 1024 * 1024   # target bytes for the double-buffered logits stream


def _dice_partials_kernel(logits_ref, tgt_ref, out_ref, *, s_tile, hw_valid, need_mask):
    """Per-(batch, HW-tile) partial sums for the dice coefficient.

    logits_ref: (1, C, S_tile, 128)  source dtype logits
    tgt_ref   : (1, S_tile, 128)     integer class ids (0 on padded pixels)
    out_ref   : (1, 1, 3, 128)       f32 lane partials [intersection, sum_p0, sum_t]
    """
    logits = logits_ref[0].astype(jnp.float32)          # (C, S_t, 128)
    t = (tgt_ref[0] > 0).astype(jnp.float32)            # (S_t, 128)  in-kernel binarize

    # Softmax over the (leading) channel axis; only channel 0 gets normalized.
    m = jnp.max(logits, axis=0)                         # (S_t, 128)  elementwise over C
    e = jnp.exp(logits - m)                             # (C, S_t, 128)
    s = jnp.sum(e, axis=0)                              # (S_t, 128)
    p0 = e[0] * pl.reciprocal(s, approx=False)          # (S_t, 128)  exact, keeps 1e-5 tol

    if need_mask:
        # Zero out contributions from pixels beyond the true H*W extent
        # (cheap VPU compare+select; only generated when padding actually exists).
        base = pl.program_id(1) * (s_tile * _LANES)
        sub = jax.lax.broadcasted_iota(jnp.int32, (s_tile, _LANES), 0)
        lane = jax.lax.broadcasted_iota(jnp.int32, (s_tile, _LANES), 1)
        valid = (base + sub * _LANES + lane) < hw_valid
        p0 = jnp.where(valid, p0, 0.0)

    inter = jnp.sum(p0 * t, axis=0, keepdims=True)      # (1, 128)
    sum_p = jnp.sum(p0, axis=0, keepdims=True)          # (1, 128)
    sum_t = jnp.sum(t, axis=0, keepdims=True)           # (1, 128)
    out_ref[0, 0] = jnp.concatenate([inter, sum_p, sum_t], axis=0)   # (3, 128)


def cross_entropy_dice_loss(inputs, targets):
    """inputs: (N, C, H, W) float logits; targets: (N, H, W) integer class ids."""
    N, C, H, W = inputs.shape
    HW = H * W

    if not jnp.issubdtype(inputs.dtype, jnp.floating):
        inputs = inputs.astype(jnp.float32)
    if not jnp.issubdtype(targets.dtype, jnp.integer):
        targets = targets.astype(jnp.int32)

    logits = inputs.reshape(N, C, HW)                    # keep source dtype (bf16 stays bf16)
    tgt = targets.reshape(N, HW)

    # Size the HW tile from a VMEM budget (double-buffered logits stream).
    itemsize = jnp.dtype(logits.dtype).itemsize
    cap = _VMEM_BUDGET // (2 * C * _LANES * itemsize)
    cap = max(8, (cap // 8) * 8)
    max_tile = min(_MAX_S_TILE, cap)

    S = pl.cdiv(HW, _LANES)
    if S <= max_tile:
        s_tile, s_pad = S, S          # block == full array dim -> no (8,128) issue
    else:
        s_tile = max_tile             # multiple of 8
        s_pad = pl.cdiv(S, s_tile) * s_tile
    hw_pad = s_pad * _LANES
    pad = hw_pad - HW
    if pad:
        logits = jnp.pad(logits, ((0, 0), (0, 0), (0, pad)))
        tgt = jnp.pad(tgt, ((0, 0), (0, pad)))           # padded pixels = class 0 (background)

    logits4 = logits.reshape(N, C, s_pad, _LANES)
    tgt3 = tgt.reshape(N, s_pad, _LANES)
    n_hw = s_pad // s_tile

    kernel = functools.partial(
        _dice_partials_kernel, s_tile=s_tile, hw_valid=HW, need_mask=bool(pad))

    partials = pl.pallas_call(
        kernel,
        out_shape=jax.ShapeDtypeStruct((N, n_hw, 3, _LANES), jnp.float32),
        grid_spec=pltpu.PrefetchScalarGridSpec(
            num_scalar_prefetch=0,
            grid=(N, n_hw),
            in_specs=[
                pl.BlockSpec((1, C, s_tile, _LANES), lambda n, h: (n, 0, h, 0)),
                pl.BlockSpec((1, s_tile, _LANES), lambda n, h: (n, h, 0)),
            ],
            out_specs=pl.BlockSpec((1, 1, 3, _LANES), lambda n, h: (n, h, 0, 0)),
        ),
        compiler_params=pltpu.CompilerParams(
            dimension_semantics=("parallel", "parallel")),
    )(logits4, tgt3)

    sums = jnp.sum(partials, axis=(1, 3))                # (N, 3)
    inter, sum_p, sum_t = sums[:, 0], sums[:, 1], sums[:, 2]
    dice = (2.0 * inter + 1.0) / (sum_p + sum_t + 1.0)
    # NOTE: the PyTorch reference also computes nn.CrossEntropyLoss(inputs, targets)
    # here and immediately discards it; it never influences the returned value, so
    # it is omitted entirely to keep the kernel dice-only.
    return jnp.mean(1.0 - dice)


def _reference(inputs, targets):
    # Pure-JAX reference for verification (matches the PyTorch forward's return).
    p = jax.nn.softmax(inputs.astype(jnp.float32), axis=1)
    N = inputs.shape[0]
    pf = p[:, 0].reshape(N, -1)
    tf = (targets > 0).astype(jnp.float32).reshape(N, -1)
    inter = jnp.sum(pf * tf, axis=1)
    dice = (2.0 * inter + 1.0) / (jnp.sum(pf, axis=1) + jnp.sum(tf, axis=1) + 1.0)
    return jnp.mean(1.0 - dice)


if __name__ == "__main__":
    key = jax.random.PRNGKey(0)
    loss_fn = jax.jit(cross_entropy_dice_loss)

    # Case 1: HW a multiple of 128 (no padding path).
    k1, k2, k3, k4 = jax.random.split(key, 4)
    N, C, H, W = 2, 4, 16, 16
    inputs = jax.random.normal(k1, (N, C, H, W), dtype=jnp.float32)
    targets = jax.random.randint(k2, (N, H, W), 0, C, dtype=jnp.int32)
    loss = jax.block_until_ready(loss_fn(inputs, targets))
    ref = _reference(inputs, targets)
    assert jnp.allclose(loss, ref, atol=1e-5, rtol=1e-5), (loss, ref)

    # Case 2: ragged HW (exercises the in-kernel validity-mask path).
    H2, W2 = 15, 15
    inputs2 = jax.random.normal(k3, (N, C, H2, W2), dtype=jnp.float32)
    targets2 = jax.random.randint(k4, (N, H2, W2), 0, C, dtype=jnp.int32)
    loss2 = jax.block_until_ready(loss_fn(inputs2, targets2))
    ref2 = _reference(inputs2, targets2)
    assert jnp.allclose(loss2, ref2, atol=1e-5, rtol=1e-5), (loss2, ref2)

    print("KERNEL_OK")
</pallas_src>

<mosaic_0001>
module attributes {stable_mosaic.version = 11 : i64} {
  func.func @_dice_partials_kernel(%arg0: i32, %arg1: i32, %arg2: memref<1x4x2x128xf32, #tpu.memory_space<vmem>>, %arg3: memref<1x2x128xi32, #tpu.memory_space<vmem>>, %arg4: memref<1x1x3x128xf32, #tpu.memory_space<vmem>>) attributes {dimension_semantics = [#tpu.dimension_semantics<parallel>, #tpu.dimension_semantics<parallel>], iteration_bounds = array<i64: 2, 1>, scalar_prefetch = 0 : i64, scratch_operands = 0 : i64, tpu.core_type = #tpu.core_type<tc>, window_params = [{transform_indices = @transform_0, window_bounds = array<i64: 1, 4, 2, 128>}, {transform_indices = @transform_1, window_bounds = array<i64: 1, 2, 128>}, {transform_indices = @transform_2, window_bounds = array<i64: 1, 1, 3, 128>}]} {
    %c0 = arith.constant 0 : index
    %c0_0 = arith.constant 0 : index
    %c0_1 = arith.constant 0 : index
    %c0_2 = arith.constant 0 : index
    %0 = vector.load %arg2[%c0, %c0_0, %c0_1, %c0_2] : memref<1x4x2x128xf32, #tpu.memory_space<vmem>>, vector<1x4x2x128xf32>
    %1 = vector.shape_cast %0 : vector<1x4x2x128xf32> to vector<4x2x128xf32>
    %c0_3 = arith.constant 0 : index
    %c0_4 = arith.constant 0 : index
    %c0_5 = arith.constant 0 : index
    %2 = vector.load %arg3[%c0_3, %c0_4, %c0_5] : memref<1x2x128xi32, #tpu.memory_space<vmem>>, vector<1x2x128xi32>
    %3 = vector.shape_cast %2 : vector<1x2x128xi32> to vector<2x128xi32>
    %c0_i32 = arith.constant 0 : i32
    %4 = vector.broadcast %c0_i32 : i32 to vector<2x128xi32>
    %5 = arith.cmpi sgt, %3, %4 : vector<2x128xi32>
    %6 = arith.extui %5 : vector<2x128xi1> to vector<2x128xi32>
    %7 = arith.sitofp %6 : vector<2x128xi32> to vector<2x128xf32>
    %cst = arith.constant dense<0xFF800000> : vector<2x128xf32>
    %8 = vector.multi_reduction <maximumf>, %1, %cst [0] : vector<4x2x128xf32> to vector<2x128xf32>
    %9 = vector.shape_cast %8 : vector<2x128xf32> to vector<1x2x128xf32>
    %10 = vector.broadcast %9 : vector<1x2x128xf32> to vector<4x2x128xf32>
    %11 = arith.subf %1, %10 : vector<4x2x128xf32>
    %12 = math.exp %11 : vector<4x2x128xf32>
    %cst_6 = arith.constant dense<0.000000e+00> : vector<2x128xf32>
    %13 = vector.multi_reduction <add>, %12, %cst_6 [0] : vector<4x2x128xf32> to vector<2x128xf32>
    %14 = vector.extract_strided_slice %12 {offsets = [0, 0, 0], sizes = [1, 2, 128], strides = [1, 1, 1]} : vector<4x2x128xf32> to vector<1x2x128xf32>
    %15 = vector.shape_cast %14 : vector<1x2x128xf32> to vector<2x128xf32>
    %16 = tpu.reciprocal %13 : vector<2x128xf32> -> vector<2x128xf32>
    %17 = arith.mulf %15, %16 : vector<2x128xf32>
    %18 = arith.mulf %17, %7 : vector<2x128xf32>
    %cst_7 = arith.constant dense<0.000000e+00> : vector<128xf32>
    %19 = vector.multi_reduction <add>, %18, %cst_7 [0] : vector<2x128xf32> to vector<128xf32>
    %20 = vector.shape_cast %19 : vector<128xf32> to vector<1x128xf32>
    %cst_8 = arith.constant dense<0.000000e+00> : vector<128xf32>
    %21 = vector.multi_reduction <add>, %17, %cst_8 [0] : vector<2x128xf32> to vector<128xf32>
    %22 = vector.shape_cast %21 : vector<128xf32> to vector<1x128xf32>
    %cst_9 = arith.constant dense<0.000000e+00> : vector<128xf32>
    %23 = vector.multi_reduction <add>, %7, %cst_9 [0] : vector<2x128xf32> to vector<128xf32>
    %24 = vector.shape_cast %23 : vector<128xf32> to vector<1x128xf32>
    %25 = tpu.concatenate %20, %22, %24 in 0 : vector<1x128xf32>, vector<1x128xf32>, vector<1x128xf32> -> vector<3x128xf32>
    %c0_10 = arith.constant 0 : index
    %c0_11 = arith.constant 0 : index
    %c0_12 = arith.constant 0 : index
    %c0_13 = arith.constant 0 : index
    %26 = vector.load %arg4[%c0_10, %c0_11, %c0_12, %c0_13] : memref<1x1x3x128xf32, #tpu.memory_space<vmem>>, vector<1x1x3x128xf32>
    %27 = vector.shape_cast %26 : vector<1x1x3x128xf32> to vector<3x128xf32>
    %28 = vector.shape_cast %25 : vector<3x128xf32> to vector<1x1x3x128xf32>
    tpu.vector_store %arg4[%c0_10, %c0_11, %c0_12, %c0_13], %28 {strides = array<i32>} : memref<1x1x3x128xf32, #tpu.memory_space<vmem>>, vector<1x1x3x128xf32>,
    return
  }
  func.func @transform_0(%arg0: i32, %arg1: i32) -> (i32, i32, i32, i32) {
    %c0_i32 = arith.constant 0 : i32
    %c0_i32_0 = arith.constant 0 : i32
    %c0_i32_1 = arith.constant 0 : i32
    return %arg0, %c0_i32, %arg1, %c0_i32_0 : i32, i32, i32, i32
  }
  func.func @transform_1(%arg0: i32, %arg1: i32) -> (i32, i32, i32) {
    %c0_i32 = arith.constant 0 : i32
    %c0_i32_0 = arith.constant 0 : i32
    return %arg0, %arg1, %c0_i32 : i32, i32, i32
  }
  func.func @transform_2(%arg0: i32, %arg1: i32) -> (i32, i32, i32, i32) {
    %c0_i32 = arith.constant 0 : i32
    %c0_i32_0 = arith.constant 0 : i32
    %c0_i32_1 = arith.constant 0 : i32
    return %arg0, %arg1, %c0_i32, %c0_i32_0 : i32, i32, i32, i32
  }
}

</mosaic_0001>

<llo_original>
// kernel: cross_entropy_dice_loss.1
$region0: #{cross_entropy_dice_loss.1}
  #allocation0 [shape = 'u32[]', space=smem, size = 0x4, offset = 0x4, fixed_abs, tag = 'smem constant byte address 0x4 - core index']
  #allocation1 [shape = 'u32[144,128]{1,0:T(1,128)}', space=vmem, size = 0x12000, scoped, tag = 'internal scratch']
  %s0 = inlined_call_operand.vmem [shape: f32[2,4,2,128], index: 0, kind: input, shape index: {}]
  %s1 = inlined_call_operand.vmem [shape: s32[2,2,128], index: 1, kind: input, shape index: {}]
  %s2 = inlined_call_operand.vmem [shape: f32[2,1,3,128], index: 2, kind: output, shape index: {}]
  %s3 = sld [smem:[#allocation0]]
  $region41: #{cross_entropy_dice_loss.1} parent=0
    _
  %s5 = ssub.s32 1, %s3
  %s6 = scalar_select 0, %s5, %s3
  loop: start=0, step=1, limit=4
  $region2: #{cross_entropy_dice_loss.1} parent=0 // loop_pre_header
    _
  $region3: #{cross_entropy_dice_loss.1} parent=0 // loop_header
    %s8 = sphi 0, %s12
    %p9 = scmp.ge.s32.totalorder %s8, 4
    %s15 = sphi 0, %s27
    %s16 = sphi 0, %s23
    %s17 = sphi 0, %s15
    %s18 = sphi 0, %s16
    %s19 = sphi 0, %s17
    %s20 = sphi 0, %s18
    %s32 = sphi 0, %s34
    %s35 = sphi 0, %s32
    %s36 = sphi 0, %s35
    %s52 = sphi 0, %s36
    %s60 = sphi 0, %s62
    %s63 = sphi 0, %s60
    %s64 = sphi 0, %s63
    %s80 = sphi 0, %s64
    %s88 = sphi 0, %s90
    %s91 = sphi 0, %s88
    %s92 = sphi 0, %s91
    %s108 = sphi 0, %s92
  $region4: #{cross_entropy_dice_loss.1} parent=0 // loop_header_branch
    %11 = sbr.rel (%p9) target = $region8
  $region5: #{cross_entropy_dice_loss.1} parent=0 // loop_body
    %s13 = ssub.s32 %s8, 1
    %s14 = ssub.s32 %s8, 2
    %s21 = sadd.s32 1, %s16
    %p22 = scmp.ge.s32.totalorder %s21, 1
    %s23 = scalar_select %p22, 0, %s21
    %s24 = sadd.s32 1, %s15
    %s25 = scalar_select %p22, %s24, %s15
    %p26 = scmp.ge.s32.totalorder %s25, 2
    %s27 = scalar_select %p26, 0, %s25
    %s28 = ssub.s32 %s15, %s27
    %s29 = ssub.s32 %s16, %s23
    %s30 = sor.u32 %s28, %s29
    %p31 = scmp.eq.s32.totalorder %s30, 0
    %s33 = sadd.s32 %s32, 1
    %s34 = scalar_select %p31, %s32, %s33
    %p37 = pneg %p31
    %p38 = scmp.eq.s32.totalorder %s8, 1
    %p39 = por %p37, %p38
    %p40 = scmp.ne.s32.totalorder %s32, %s35
    %p41 = scmp.eq.s32.totalorder %s8, 0
    %p42 = por %p40, %p41
    %p43 = scmp.ne.s32.totalorder %s32, %s35
    %p44 = scmp.eq.s32.totalorder %s13, 1
    %p45 = por %p43, %p44
    %p46 = scmp.ne.s32.totalorder %s35, %s36
    %p47 = scmp.eq.s32.totalorder %s13, 0
    %p48 = por %p46, %p47
    %p49 = scmp.ne.s32.totalorder %s35, %s36
    %p50 = scmp.eq.s32.totalorder %s14, 1
    %p51 = por %p49, %p50
    %p53 = scmp.ne.s32.totalorder %s36, %s52
    %p54 = scmp.eq.s32.totalorder %s14, 0
    %p55 = por %p53, %p54
    %s56 = ssub.s32 %s15, %s27
    %s57 = ssub.s32 %s16, %s23
    %s58 = sor.u32 %s56, %s57
    %p59 = scmp.eq.s32.totalorder %s58, 0
    %s61 = sadd.s32 %s60, 1
    %s62 = scalar_select %p59, %s60, %s61
    %p65 = pneg %p59
    %p66 = scmp.eq.s32.totalorder %s8, 1
    %p67 = por %p65, %p66
    %p68 = scmp.ne.s32.totalorder %s60, %s63
    %p69 = scmp.eq.s32.totalorder %s8, 0
    %p70 = por %p68, %p69
    %p71 = scmp.ne.s32.totalorder %s60, %s63
    %p72 = scmp.eq.s32.totalorder %s13, 1
    %p73 = por %p71, %p72
    %p74 = scmp.ne.s32.totalorder %s63, %s64
    %p75 = scmp.eq.s32.totalorder %s13, 0
    %p76 = por %p74, %p75
    %p77 = scmp.ne.s32.totalorder %s63, %s64
    %p78 = scmp.eq.s32.totalorder %s14, 1
    %p79 = por %p77, %p78
    %p81 = scmp.ne.s32.totalorder %s64, %s80
    %p82 = scmp.eq.s32.totalorder %s14, 0
    %p83 = por %p81, %p82
    %s84 = ssub.s32 %s15, %s27
    %s85 = ssub.s32 %s16, %s23
    %s86 = sor.u32 %s84, %s85
    %p87 = scmp.eq.s32.totalorder %s86, 0
    %s89 = sadd.s32 %s88, 1
    %s90 = scalar_select %p87, %s88, %s89
    %p93 = pneg %p87
    %p94 = scmp.eq.s32.totalorder %s8, 1
    %p95 = por %p93, %p94
    %p96 = scmp.ne.s32.totalorder %s88, %s91
    %p97 = scmp.eq.s32.totalorder %s8, 0
    %p98 = por %p96, %p97
    %p99 = scmp.ne.s32.totalorder %s88, %s91
    %p100 = scmp.eq.s32.totalorder %s13, 1
    %p101 = por %p99, %p100
    %p102 = scmp.ne.s32.totalorder %s91, %s92
    %p103 = scmp.eq.s32.totalorder %s13, 0
    %p104 = por %p102, %p103
    %p105 = scmp.ne.s32.totalorder %s91, %s92
    %p106 = scmp.eq.s32.totalorder %s14, 1
    %p107 = por %p105, %p106
    %p109 = scmp.ne.s32.totalorder %s92, %s108
    %p110 = scmp.eq.s32.totalorder %s14, 0
    %p111 = por %p109, %p110
    %p112 = scmp.le.s32.totalorder 1, %s8
    %p113 = scmp.lt.s32.totalorder %s8, 3
    %p114 = pnand %p112, %p113
    %p115 = pneg %p114
    // Predicated region
    $region9: #{cross_entropy_dice_loss.1} parent=5 // pred_check
      _
    $region10: #{cross_entropy_dice_loss.1} parent=5 // pred_check_branch
      %117 = sbr.rel (%p114) target = $region12
    $region11: #{cross_entropy_dice_loss.1} parent=5 // pred_region
      %s118 = ssub.s32 %s8, 1
    $region12: #{cross_entropy_dice_loss.1} parent=5 // pred_fallthru
      _
    %p119 = scmp.lt.s32.totalorder %s8, 2
    // Predicated region
    $region13: #{cross_entropy_dice_loss.1} parent=5 // pred_check
      %p120 = pneg %p119
    $region14: #{cross_entropy_dice_loss.1} parent=5 // pred_check_branch
      %122 = sbr.rel (%p120) target = $region16
    $region15: #{cross_entropy_dice_loss.1} parent=5 // pred_region
      // Predicated region
      $region17: #{cross_entropy_dice_loss.1} parent=15 // pred_check
        %p123 = pneg %p42
      $region18: #{cross_entropy_dice_loss.1} parent=15 // pred_check_branch
        %125 = sbr.rel (%p123) target = $region20
      $region19: #{cross_entropy_dice_loss.1} parent=15 // pred_region
        %p126 = scmp.lt.s32.totalorder %s15, 1
        %s127 = scalar_select %p126, %s15, 1
        %p128 = scmp.lt.s32.totalorder %s16, 0
        %s129 = scalar_select %p128, %s16, 0
        %s130 = smul.addr %s127, 4
        %s131 = sadd.s32 %s129, %s130
        %s132 = smul.addr %s131, 2
        %s133 = scalar_lea.vmem %s0, %s132
      $region20: #{cross_entropy_dice_loss.1} parent=15 // pred_fallthru
        _
      // Predicated region
      $region21: #{cross_entropy_dice_loss.1} parent=15 // pred_check
        %p134 = pneg %p70
      $region22: #{cross_entropy_dice_loss.1} parent=15 // pred_check_branch
        %136 = sbr.rel (%p134) target = $region24
      $region23: #{cross_entropy_dice_loss.1} parent=15 // pred_region
        %p137 = scmp.lt.s32.totalorder %s15, 1
        %s138 = scalar_select %p137, %s15, 1
        %p139 = scmp.lt.s32.totalorder %s16, 0
        %s140 = scalar_select %p139, %s16, 0
        %s141 = sadd.s32 %s140, %s138
        %s142 = smul.addr %s141, 2
        %s143 = scalar_lea.vmem %s1, %s142
      $region24: #{cross_entropy_dice_loss.1} parent=15 // pred_fallthru
        _
    $region16: #{cross_entropy_dice_loss.1} parent=5 // pred_fallthru
      _
    %p144 = scmp.le.s32.totalorder 1, %s8
    %p145 = scmp.lt.s32.totalorder %s8, 3
    %p146 = pnand %p144, %p145
    %p147 = pneg %p146
    // Predicated region
    $region25: #{cross_entropy_dice_loss.1} parent=5 // pred_check
      _
    $region26: #{cross_entropy_dice_loss.1} parent=5 // pred_check_branch
      %149 = sbr.rel (%p146) target = $region28
    $region27: #{cross_entropy_dice_loss.1} parent=5 // pred_region
      %s150 = ssub.s32 %s8, 1
      %p151 = scmp.lt.s32.totalorder %s17, 1
      %s152 = scalar_select %p151, %s17, 1
      %p153 = scmp.lt.s32.totalorder %s18, 0
      %s154 = scalar_select %p153, %s18, 0
      %s155 = smul.addr %s152, 4
      %s156 = sadd.s32 %s154, %s155
      %s157 = smul.addr %s156, 2
      %s158 = scalar_lea.vmem %s0, %s157
      %p159 = pneg %p48
      %p160 = pneg %p45
      %p161 = scmp.lt.s32.totalorder %s17, 1
      %s162 = scalar_select %p161, %s17, 1
      %p163 = scmp.lt.s32.totalorder %s18, 0
      %s164 = scalar_select %p163, %s18, 0
      %s165 = sadd.s32 %s164, %s162
      %s166 = smul.addr %s165, 2
      %s167 = scalar_lea.vmem %s1, %s166
      %p168 = pneg %p76
      %p169 = pneg %p73
      %p170 = pneg %p104
      %p171 = pneg %p101
      %p172 = scmp.lt.s32.totalorder %s17, 1
      %s173 = scalar_select %p172, %s17, 1
      %p174 = scmp.lt.s32.totalorder %s18, 0
      %s175 = scalar_select %p174, %s18, 0
      %s176 = sadd.s32 %s175, %s173
      %s177 = smul.addr %s176, 4
      %s178 = scalar_lea.vmem %s2, %s177
      %p179 = scmp.lt.s32.totalorder %s17, 1
      %s180 = scalar_select %p179, %s17, 1
      %p181 = scmp.lt.s32.totalorder %s18, 0
      %s182 = scalar_select %p181, %s18, 0
      %s183 = smul.addr %s180, 4
      %s184 = sadd.s32 %s182, %s183
      %s185 = smul.addr %s184, 2
      %s186 = scalar_lea.vmem %s0, %s185
      %p187 = scmp.lt.s32.totalorder %s17, 1
      %s188 = scalar_select %p187, %s17, 1
      %p189 = scmp.lt.s32.totalorder %s18, 0
      %s190 = scalar_select %p189, %s18, 0
      %s191 = sadd.s32 %s190, %s188
      %s192 = smul.addr %s191, 2
      %s193 = scalar_lea.vmem %s1, %s192
      %p194 = scmp.lt.s32.totalorder %s17, 1
      %s195 = scalar_select %p194, %s17, 1
      %p196 = scmp.lt.s32.totalorder %s18, 0
      %s197 = scalar_select %p196, %s18, 0
      %s198 = sadd.s32 %s197, %s195
      %s199 = smul.addr %s198, 4
      %s200 = scalar_lea.vmem %s2, %s199
      %v201 = vld [vmem:[%s186] sm:$0x3]
      %v202 = vld [vmem:[%s186 + $0x2] sm:$0x3]
      %v203 = vld [vmem:[%s186 + $0x4] sm:$0x3]
      %v204 = vld [vmem:[%s186 + $0x6] sm:$0x3]
      %v205 = vld [vmem:[%s193] sm:$0x3]
      %vm206 = vcmp.gt.s32.totalorder %v205, 0
      %v207 = vsel %vm206, 1, 0
      %v208 = vcvt.s32.f32 %v207
      %vm209 = vcmask 1041408
      %v210 = vsel %vm209, %v201, -inf
      %v211 = vsel %vm209, %v202, -inf
      %v212 = vsel %vm209, %v203, -inf
      %v213 = vsel %vm209, %v204, -inf
      %v214 = vmax.f32 %v210, %v211
      %v215 = vmax.f32 %v212, %v213
      %v216 = vmax.f32 %v214, %v215
      %v217 = vsub.f32 %v201, %v216
      %v218 = vsub.f32 %v202, %v216
      %v219 = vsub.f32 %v203, %v216
      %v220 = vsub.f32 %v204, %v216
      %v221 = vmul.f32 %v217, 1.442695
      %v222 = vpow.pop %v221
      %v223 = vmul.f32 %v218, 1.442695
      %v224 = vpow.pop %v223
      %v225 = vmul.f32 %v219, 1.442695
      %v226 = vpow.pop %v225
      %v227 = vmul.f32 %v220, 1.442695
      %v228 = vpow.pop %v227
      %v229 = vsel %vm209, %v222, 0.0
      %v230 = vsel %vm209, %v224, 0.0
      %v231 = vadd.f32 %v229, %v230
      %v232 = vsel %vm209, %v226, 0.0
      %v233 = vadd.f32 %v231, %v232
      %v234 = vsel %vm209, %v228, 0.0
      %v235 = vadd.f32 %v233, %v234
      %v236 = vrcp.pop %v235
      %v237 = vmul.f32 %v222, %v236
      %v238 = vmul.f32 %v237, %v208
      %v239 = vsel %vm209, %v238, 0.0
      %v240 = vrot.slane %v239, 4
      %v241 = vadd.f32 %v239, %v240
      %v242 = vrot.slane %v241, 2
      %v243 = vadd.f32 %v241, %v242
      %v244 = vrot.slane %v243, 1
      %v245 = vadd.f32 %v243, %v244
      %v246 = vsel %vm209, %v237, 0.0
      %v247 = vrot.slane %v246, 4
      %v248 = vadd.f32 %v246, %v247
      %v249 = vrot.slane %v248, 2
      %v250 = vadd.f32 %v248, %v249
      %v251 = vrot.slane %v250, 1
      %v252 = vadd.f32 %v250, %v251
      %v253 = vsel %vm209, %v208, 0.0
      %v254 = vrot.slane %v253, 4
      %v255 = vadd.f32 %v253, %v254
      %v256 = vrot.slane %v255, 2
      %v257 = vadd.f32 %v255, %v256
      %v258 = vrot.slane %v257, 1
      %v259 = vadd.f32 %v257, %v258
      %vm260 = vcmask 1040384
      %v261 = vsel %vm260, %v245, %v252
      %v262 = vsel %vm209, %v261, %v259
      %263 = vst [vmem:[%s200] sm:$0x7] %v262
      %p264 = scmp.lt.s32.totalorder %s17, 1
      %s265 = scalar_select %p264, %s17, 1
      %p266 = scmp.lt.s32.totalorder %s18, 0
      %s267 = scalar_select %p266, %s18, 0
      %s268 = sadd.s32 %s267, %s265
      %s269 = smul.addr %s268, 4
      %s270 = scalar_lea.vmem %s2, %s269
      // Predicated region
      $region29: #{cross_entropy_dice_loss.1} parent=27 // pred_check
        %p271 = pneg %p101
      $region30: #{cross_entropy_dice_loss.1} parent=27 // pred_check_branch
        %273 = sbr.rel (%p271) target = $region32
      $region31: #{cross_entropy_dice_loss.1} parent=27 // pred_region
        _
      $region32: #{cross_entropy_dice_loss.1} parent=27 // pred_fallthru
        _
    $region28: #{cross_entropy_dice_loss.1} parent=5 // pred_fallthru
      _
    %p274 = scmp.le.s32.totalorder 2, %s8
    // Predicated region
    $region33: #{cross_entropy_dice_loss.1} parent=5 // pred_check
      %p275 = pneg %p274
    $region34: #{cross_entropy_dice_loss.1} parent=5 // pred_check_branch
      %277 = sbr.rel (%p275) target = $region36
    $region35: #{cross_entropy_dice_loss.1} parent=5 // pred_region
      %s278 = ssub.s32 %s8, 2
      // Predicated region
      $region37: #{cross_entropy_dice_loss.1} parent=35 // pred_check
        %p279 = pneg %p107
      $region38: #{cross_entropy_dice_loss.1} parent=35 // pred_check_branch
        %281 = sbr.rel (%p279) target = $region40
      $region39: #{cross_entropy_dice_loss.1} parent=35 // pred_region
        %p282 = scmp.lt.s32.totalorder %s19, 1
        %s283 = scalar_select %p282, %s19, 1
        %p284 = scmp.lt.s32.totalorder %s20, 0
        %s285 = scalar_select %p284, %s20, 0
        %s286 = sadd.s32 %s285, %s283
        %s287 = smul.addr %s286, 4
        %s288 = scalar_lea.vmem %s2, %s287
      $region40: #{cross_entropy_dice_loss.1} parent=35 // pred_fallthru
        _
    $region36: #{cross_entropy_dice_loss.1} parent=5 // pred_fallthru
      _
  $region6: #{cross_entropy_dice_loss.1} parent=0 // loop_footer
    %s12 = sadd.s32 1, %s8
  $region7: #{cross_entropy_dice_loss.1} parent=0 // loop_footer_branch
    %7 = sbr.rel target = $region3
  $region8: #{cross_entropy_dice_loss.1} parent=0 // loop_exit
    _

</llo_original>
